<compile_context>
chip_gen: v5e
topology: v5e:2x2
jax: 0.10.0
libtpu: 0.0.40
codegen_flags: <defaults>
</compile_context>

<pallas_src>
import functools

import jax
import jax.numpy as jnp
import numpy as np
from jax.experimental import pallas as pl
from jax.experimental.pallas import tpu as pltpu


def _round_up(x, m):
    return ((x + m - 1) // m) * m


def _tmse_kernel(x_ref, n_ref, w_ref, o_ref, *, threshold):
    """One block of rows. Each row = one (sample, class) pair; time on lanes.

    x_ref: (Rblk, Tp) f32   compacted logits, frames [0, n) valid, rest padding
    n_ref: (Rblk, 1)  i32   valid (compacted) frame count of the row's sample
    w_ref: (Rblk, 1)  f32   per-row weight = 1/(C*(n-1)) (0 if n <= 1 / padded row)
    o_ref: (1, 1)     f32   partial sum over this block of per-sample means
    """
    x = x_ref[...].astype(jnp.float32)                  # (R, Tp)
    n = n_ref[...]                                      # (R, 1) int32
    w = w_ref[...]                                      # (R, 1) f32

    r, tp = x.shape
    t = jax.lax.broadcasted_iota(jnp.int32, (r, tp), 1)
    big_neg = jnp.float32(-1e30)

    valid = t < n                                       # frames 0 .. n-1

    # ---- fused log-sum-exp: one max, one exp pass, one lane sum -------------
    m = jnp.max(jnp.where(valid, x, big_neg), axis=-1, keepdims=True)     # (R,1)
    e = jnp.where(valid, jnp.exp(x - m), jnp.float32(0.0))                # (R,Tp)
    s = jnp.sum(e, axis=-1, keepdims=True)                                # (R,1)
    e_first = e[:, 0:1]                                                   # exp(x[:,0]   - m)
    e_last = jnp.sum(jnp.where(t == n - 1, e, jnp.float32(0.0)),
                     axis=-1, keepdims=True)                              # exp(x[:,n-1] - m)
    tiny = jnp.float32(1e-30)
    lse_next = m + jnp.log(jnp.maximum(s - e_first, tiny))   # LSE over frames 1 .. n-1
    lse_prev = m + jnp.log(jnp.maximum(s - e_last, tiny))    # LSE over frames 0 .. n-2

    # x_next[:, t] = x[:, t+1]  (XLU lane rotate; the wrapped last column is
    # always excluded by pair_mask below since pairs stop at n-2 <= Tp-2).
    x_next = pltpu.roll(x, shift=tp - 1, axis=1)

    # log_softmax(pred[:,1:])[t] - log_softmax(pred[:,:-1])[t]
    #   = (x[:,t+1] - lse_next) - (x[:,t] - lse_prev)
    diff = (x_next - x) + (lse_prev - lse_next)
    sq = jnp.clip(diff * diff, jnp.float32(0.0), jnp.float32(threshold * threshold))

    pair_mask = t < n - 1                                # valid adjacent pairs 0 .. n-2
    row_sum = jnp.sum(jnp.where(pair_mask, sq, jnp.float32(0.0)),
                      axis=-1, keepdims=True)            # (R,1)

    # Per-sample mean = sum over its C rows of row_sum * 1/(C*(n-1)); rows with
    # n <= 1 (or padded rows) have w = 0 and contribute exactly 0.
    o_ref[...] = jnp.reshape(jnp.sum(row_sum * w), (1, 1))


def _tmse_pallas(x_rows, n_rows, w_rows, threshold, rblk):
    r_pad, tp = x_rows.shape
    num_blocks = r_pad // rblk

    kernel = functools.partial(_tmse_kernel, threshold=threshold)
    cost = pl.CostEstimate(
        flops=int(10 * r_pad * tp),
        transcendentals=int(r_pad * tp),
        bytes_accessed=int(r_pad * tp * 4 + 2 * r_pad * 4 + num_blocks * 4),
    )
    # block (double-buffered) + in-kernel f32 temporaries; clamp so it fits every
    # generation (v7x has only 64 MiB physical VMEM per TensorCore).
    vmem_limit = int(min(max(8 * rblk * tp * 4 + (1 << 20), 32 << 20), 48 << 20))

    return pl.pallas_call(
        kernel,
        out_shape=jax.ShapeDtypeStruct((num_blocks, 1), jnp.float32),
        grid=(num_blocks,),
        in_specs=[
            pl.BlockSpec((rblk, tp), lambda i: (i, 0)),
            pl.BlockSpec((rblk, 1), lambda i: (i, 0)),
            pl.BlockSpec((rblk, 1), lambda i: (i, 0)),
        ],
        out_specs=pl.BlockSpec((1, 1), lambda i: (i, 0)),
        compiler_params=pltpu.CompilerParams(
            dimension_semantics=("parallel",),   # row blocks are independent (v7x: 2 TCs)
            vmem_limit_bytes=vmem_limit,
        ),
        cost_estimate=cost,
    )(x_rows, n_rows, w_rows)


@functools.partial(jax.jit, static_argnames=("threshold", "ignore_index"))
def tmse_loss(preds, gts, threshold=4, ignore_index=255):
    """Pallas TMSE.  preds: (B, C, T) float, gts: (B, T) int."""
    B, C, T = preds.shape
    preds = preds.astype(jnp.float32)

    # ---- static-shape compaction of non-ignored frames (fully jittable) -----
    keep = gts != ignore_index                                   # (B, T) bool
    n_valid = jnp.sum(keep, axis=1).astype(jnp.int32)            # (B,)
    # stable argsort of (not keep) moves kept frames to the front, preserving order
    order = jnp.argsort(jnp.logical_not(keep).astype(jnp.int32), axis=1, stable=True)
    preds_c = jnp.take_along_axis(preds, order[:, None, :], axis=2)   # (B, C, T)

    # ---- pad time to a lane multiple, fold (B, C) onto the sublane axis -----
    Tp = _round_up(max(T, 1), 128)
    x_rows = jnp.pad(preds_c, ((0, 0), (0, 0), (0, Tp - T))).reshape(B * C, Tp)

    n_rows = jnp.repeat(n_valid, C)                              # (B*C,)
    denom = (C * jnp.maximum(n_valid - 1, 1)).astype(jnp.float32)
    w_valid = jnp.where(n_valid > 1, 1.0 / denom, 0.0)           # guard n <= 1
    w_rows = jnp.repeat(w_valid, C).astype(jnp.float32)          # (B*C,)

    # ---- choose a row-block size (multiple of 8, ~<=1 MiB of f32 per block) --
    R = B * C
    rows_budget = max(8, ((1 << 20) // (Tp * 4)) // 8 * 8)
    Rblk = int(min(rows_budget, _round_up(R, 8)))
    R_pad = _round_up(R, Rblk)
    x_rows = jnp.pad(x_rows, ((0, R_pad - R), (0, 0)))
    n_rows = jnp.pad(n_rows, (0, R_pad - R)).reshape(R_pad, 1)
    w_rows = jnp.pad(w_rows, (0, R_pad - R)).reshape(R_pad, 1)

    # TODO(synk): PyTorch applies .detach() to the previous-frame log_softmax; this
    # forward-only kernel matches values but not gradients of that detached branch.
    partials = _tmse_pallas(x_rows, n_rows, w_rows, int(threshold), Rblk)  # (num_blocks, 1)
    return jnp.sum(partials) / B


def tmse_ref(preds, gts, threshold=4, ignore_index=255):
    """Pure-JAX (eager) reference mirroring the PyTorch forward exactly."""
    B = preds.shape[0]
    total = jnp.float32(0.0)
    for b in range(B):
        keep = jnp.where(gts[b] != ignore_index)[0]
        p = preds[b][:, keep]
        ls_next = jax.nn.log_softmax(p[:, 1:], axis=1)
        ls_prev = jax.nn.log_softmax(p[:, :-1], axis=1)
        loss = jnp.clip((ls_next - ls_prev) ** 2, 0.0, float(threshold ** 2))
        total = total + jnp.mean(loss)
    return total / B


if __name__ == "__main__":
    key = jax.random.PRNGKey(0)
    k1, k2, k3 = jax.random.split(key, 3)
    B, C, T = 2, 4, 16
    preds = jax.random.normal(k1, (B, C, T), dtype=jnp.float32)
    gts = jax.random.randint(k2, (B, T), 0, C).astype(jnp.int32)
    # sprinkle some ignore_index frames to exercise the filtering path
    ignore_mask = jax.random.bernoulli(k3, 0.2, (B, T))
    gts = jnp.where(ignore_mask, 255, gts).astype(jnp.int32)

    out = tmse_loss(preds, gts, threshold=4, ignore_index=255)
    out = jax.block_until_ready(out)

    ref = tmse_ref(preds, gts, threshold=4, ignore_index=255)
    np.testing.assert_allclose(np.asarray(out), np.asarray(ref), rtol=1e-5, atol=1e-5)
    print("KERNEL_OK")
</pallas_src>

<mosaic_0001>
module attributes {stable_mosaic.version = 11 : i64} {
  func.func @_tmse_kernel(%arg0: i32, %arg1: memref<8x128xf32, #tpu.memory_space<vmem>>, %arg2: memref<8x1xi32, #tpu.memory_space<vmem>>, %arg3: memref<8x1xf32, #tpu.memory_space<vmem>>, %arg4: memref<1x1xf32, #tpu.memory_space<vmem>>) attributes {dimension_semantics = [#tpu.dimension_semantics<parallel>], iteration_bounds = array<i64: 1>, scalar_prefetch = 0 : i64, scratch_operands = 0 : i64, tpu.core_type = #tpu.core_type<tc>, window_params = [{transform_indices = @transform_0, window_bounds = array<i64: 8, 128>}, {transform_indices = @transform_1, window_bounds = array<i64: 8, 1>}, {transform_indices = @transform_2, window_bounds = array<i64: 8, 1>}, {transform_indices = @transform_3, window_bounds = array<i64: 1, 1>}]} {
    %c0 = arith.constant 0 : index
    %c0_0 = arith.constant 0 : index
    %0 = vector.load %arg1[%c0, %c0_0] : memref<8x128xf32, #tpu.memory_space<vmem>>, vector<8x128xf32>
    %c0_1 = arith.constant 0 : index
    %c0_2 = arith.constant 0 : index
    %1 = vector.load %arg2[%c0_1, %c0_2] : memref<8x1xi32, #tpu.memory_space<vmem>>, vector<8x1xi32>
    %c0_3 = arith.constant 0 : index
    %c0_4 = arith.constant 0 : index
    %2 = vector.load %arg3[%c0_3, %c0_4] : memref<8x1xf32, #tpu.memory_space<vmem>>, vector<8x1xf32>
    %3 = tpu.iota {dimensions = array<i32: 1>} : vector<8x128xi32>
    %4 = vector.broadcast %1 : vector<8x1xi32> to vector<8x128xi32>
    %5 = arith.cmpi slt, %3, %4 : vector<8x128xi32>
    %cst = arith.constant -1.000000e+30 : f32
    %6 = vector.broadcast %cst : f32 to vector<8x128xf32>
    %7 = arith.select %5, %0, %6 : vector<8x128xi1>, vector<8x128xf32>
    %cst_5 = arith.constant dense<0xFF800000> : vector<8xf32>
    %8 = vector.multi_reduction <maximumf>, %7, %cst_5 [1] : vector<8x128xf32> to vector<8xf32>
    %9 = vector.shape_cast %8 : vector<8xf32> to vector<8x1xf32>
    %10 = vector.broadcast %9 : vector<8x1xf32> to vector<8x128xf32>
    %11 = arith.subf %0, %10 : vector<8x128xf32>
    %12 = math.exp %11 : vector<8x128xf32>
    %cst_6 = arith.constant 0.000000e+00 : f32
    %13 = vector.broadcast %cst_6 : f32 to vector<8x128xf32>
    %14 = arith.select %5, %12, %13 : vector<8x128xi1>, vector<8x128xf32>
    %cst_7 = arith.constant dense<0.000000e+00> : vector<8xf32>
    %15 = vector.multi_reduction <add>, %14, %cst_7 [1] : vector<8x128xf32> to vector<8xf32>
    %16 = vector.shape_cast %15 : vector<8xf32> to vector<8x1xf32>
    %17 = vector.extract_strided_slice %14 {offsets = [0, 0], sizes = [8, 1], strides = [1, 1]} : vector<8x128xf32> to vector<8x1xf32>
    %c1_i32 = arith.constant 1 : i32
    %18 = vector.broadcast %c1_i32 : i32 to vector<8x1xi32>
    %19 = arith.subi %1, %18 : vector<8x1xi32>
    %20 = vector.broadcast %19 : vector<8x1xi32> to vector<8x128xi32>
    %21 = arith.cmpi eq, %3, %20 : vector<8x128xi32>
    %cst_8 = arith.constant 0.000000e+00 : f32
    %22 = vector.broadcast %cst_8 : f32 to vector<8x128xf32>
    %23 = arith.select %21, %14, %22 : vector<8x128xi1>, vector<8x128xf32>
    %cst_9 = arith.constant dense<0.000000e+00> : vector<8xf32>
    %24 = vector.multi_reduction <add>, %23, %cst_9 [1] : vector<8x128xf32> to vector<8xf32>
    %25 = vector.shape_cast %24 : vector<8xf32> to vector<8x1xf32>
    %26 = arith.subf %16, %17 : vector<8x1xf32>
    %cst_10 = arith.constant 1.000000e-30 : f32
    %27 = vector.broadcast %cst_10 : f32 to vector<8x1xf32>
    %28 = arith.maximumf %26, %27 : vector<8x1xf32>
    %29 = math.log %28 : vector<8x1xf32>
    %30 = arith.addf %9, %29 : vector<8x1xf32>
    %31 = arith.subf %16, %25 : vector<8x1xf32>
    %cst_11 = arith.constant 1.000000e-30 : f32
    %32 = vector.broadcast %cst_11 : f32 to vector<8x1xf32>
    %33 = arith.maximumf %31, %32 : vector<8x1xf32>
    %34 = math.log %33 : vector<8x1xf32>
    %35 = arith.addf %9, %34 : vector<8x1xf32>
    %c127_i32 = arith.constant 127 : i32
    %36 = tpu.dynamic_rotate %0 by %c127_i32 dim 1 : vector<8x128xf32>, i32 -> vector<8x128xf32>
    %37 = arith.subf %36, %0 : vector<8x128xf32>
    %38 = arith.subf %35, %30 : vector<8x1xf32>
    %39 = vector.broadcast %38 : vector<8x1xf32> to vector<8x128xf32>
    %40 = arith.addf %37, %39 : vector<8x128xf32>
    %41 = arith.mulf %40, %40 : vector<8x128xf32>
    %cst_12 = arith.constant 0.000000e+00 : f32
    %cst_13 = arith.constant 1.600000e+01 : f32
    %42 = vector.broadcast %cst_12 : f32 to vector<8x128xf32>
    %43 = arith.maximumf %42, %41 : vector<8x128xf32>
    %44 = vector.broadcast %cst_13 : f32 to vector<8x128xf32>
    %45 = arith.minimumf %44, %43 : vector<8x128xf32>
    %c1_i32_14 = arith.constant 1 : i32
    %46 = vector.broadcast %c1_i32_14 : i32 to vector<8x1xi32>
    %47 = arith.subi %1, %46 : vector<8x1xi32>
    %48 = vector.broadcast %47 : vector<8x1xi32> to vector<8x128xi32>
    %49 = arith.cmpi slt, %3, %48 : vector<8x128xi32>
    %cst_15 = arith.constant 0.000000e+00 : f32
    %50 = vector.broadcast %cst_15 : f32 to vector<8x128xf32>
    %51 = arith.select %49, %45, %50 : vector<8x128xi1>, vector<8x128xf32>
    %cst_16 = arith.constant dense<0.000000e+00> : vector<8xf32>
    %52 = vector.multi_reduction <add>, %51, %cst_16 [1] : vector<8x128xf32> to vector<8xf32>
    %53 = vector.shape_cast %52 : vector<8xf32> to vector<8x1xf32>
    %54 = arith.mulf %53, %2 : vector<8x1xf32>
    %55 = vector.shape_cast %54 : vector<8x1xf32> to vector<1x8x1xf32>
    %cst_17 = arith.constant dense<0.000000e+00> : vector<1xf32>
    %56 = vector.multi_reduction <add>, %55, %cst_17 [1, 2] : vector<1x8x1xf32> to vector<1xf32>
    %57 = vector.shape_cast %56 : vector<1xf32> to vector<1x1x1xf32>
    %58 = vector.extract %57[0, 0, 0] : f32 from vector<1x1x1xf32>
    %59 = vector.broadcast %58 : f32 to vector<1x1xf32>
    %c0_18 = arith.constant 0 : index
    %c0_19 = arith.constant 0 : index
    %60 = vector.load %arg4[%c0_18, %c0_19] : memref<1x1xf32, #tpu.memory_space<vmem>>, vector<1x1xf32>
    tpu.vector_store %arg4[%c0_18, %c0_19], %59 {strides = array<i32>} : memref<1x1xf32, #tpu.memory_space<vmem>>, vector<1x1xf32>,
    return
  }
  func.func @transform_0(%arg0: i32) -> (i32, i32) {
    %c0_i32 = arith.constant 0 : i32
    %c0_i32_0 = arith.constant 0 : i32
    return %arg0, %c0_i32 : i32, i32
  }
  func.func @transform_1(%arg0: i32) -> (i32, i32) {
    %c0_i32 = arith.constant 0 : i32
    %c0_i32_0 = arith.constant 0 : i32
    return %arg0, %c0_i32 : i32, i32
  }
  func.func @transform_2(%arg0: i32) -> (i32, i32) {
    %c0_i32 = arith.constant 0 : i32
    %c0_i32_0 = arith.constant 0 : i32
    return %arg0, %c0_i32 : i32, i32
  }
  func.func @transform_3(%arg0: i32) -> (i32, i32) {
    %c0_i32 = arith.constant 0 : i32
    %c0_i32_0 = arith.constant 0 : i32
    return %arg0, %c0_i32 : i32, i32
  }
}

</mosaic_0001>

<llo_original>
// kernel: tmse_loss.1
$region0: #{tmse_loss.1}
  #allocation0 [shape = 'u32[]', space=smem, size = 0x4, offset = 0x4, fixed_abs, tag = 'smem constant byte address 0x4 - core index']
  #allocation1 [shape = 'u32[72,128]{1,0:T(1,128)}', space=vmem, size = 0x9000, scoped, tag = 'internal scratch']
  %s0 = inlined_call_operand.vmem [shape: f32[8,128], index: 0, kind: input, shape index: {}]
  %s1 = inlined_call_operand.vmem [shape: s32[8,1], index: 1, kind: input, shape index: {}]
  %s2 = inlined_call_operand.vmem [shape: f32[8,1], index: 2, kind: input, shape index: {}]
  %s3 = inlined_call_operand.hbm [shape: f32[1,1], index: 3, kind: output, shape index: {}]
  %s4 = sld [smem:[#allocation0]]
  $region22: #{tmse_loss.1} parent=0
    _
  %s6 = ssub.s32 1, %s4
  %s7 = scalar_select 0, %s6, %s4
  $region1: #{tmse_loss.1} parent=0
    #allocation2 [shape = 'u8[512]{0}', space=vmem, size = 0x400, scoped, tag = 'output window, operand 0, single buffered']
    #allocation3 [shape = 's32[1]{0}', space=sflag, size = 0x4, scoped, tag = 'scoped memory for tmse_loss.1']
    %8 = vsyncpa [#allocation3], 0
    // Predicated region
    $region2: #{tmse_loss.1} parent=1 // pred_check
      _
    $region3: #{tmse_loss.1} parent=1 // pred_check_branch
      %10 = sbr.rel (0) target = $region5
    $region4: #{tmse_loss.1} parent=1 // pred_region
      _
    $region5: #{tmse_loss.1} parent=1 // pred_fallthru
      _
    // Predicated region
    $region6: #{tmse_loss.1} parent=1 // pred_check
      _
    $region7: #{tmse_loss.1} parent=1 // pred_check_branch
      %12 = sbr.rel (0) target = $region9
    $region8: #{tmse_loss.1} parent=1 // pred_region
      _
    $region9: #{tmse_loss.1} parent=1 // pred_fallthru
      _
    // Predicated region
    $region10: #{tmse_loss.1} parent=1 // pred_check
      _
    $region11: #{tmse_loss.1} parent=1 // pred_check_branch
      %14 = sbr.rel (0) target = $region13
    $region12: #{tmse_loss.1} parent=1 // pred_region
      _
    $region13: #{tmse_loss.1} parent=1 // pred_fallthru
      _
    %v15 = vld [vmem:[%s0] sm:$0xff]
    %v16 = vld [vmem:[%s1] sm:$0xff]
    %v17 = vld [vmem:[%s2] sm:$0xff]
    %v18 = vlaneseq
    %v19 = vand.u32 %v18, 127
    %20 = vset.pattern.permute.xlu0 0
    %21 = vperm.xlu0 %20, %v16
    %v22 = vpop.permute.xlu0 %21
    %vm23 = vcmp.lt.s32.totalorder %v19, %v22
    %v24 = vsel %vm23, %v15, -1e+30
    %25 = vmax.xlane.f32.xlu0 %v24
    %v26 = vpop.xlane.xlu0 %25
    %v27 = vsub.f32 %v15, %v26
    %v28 = vmul.f32 %v27, 1.442695
    %v29 = vpow.pop %v28
    %v30 = vsel %vm23, %v29, 0.0
    %31 = vadd.xlane.f32.xlu0 %v30
    %v32 = vpop.xlane.xlu0 %31
    %v33 = vsub.s32 %v16, 1
    %34 = vset.pattern.permute.xlu0 0
    %35 = vperm.xlu0 %34, %v33
    %v36 = vpop.permute.xlu0 %35
    %vm37 = vcmp.eq.s32.totalorder %v19, %v36
    %v38 = vsel %vm37, %v30, 0.0
    %39 = vadd.xlane.f32.xlu0 %v38
    %v40 = vpop.xlane.xlu0 %39
    %v41 = vsub.f32 %v32, %v30
    %v42 = vmax.f32 %v41, 1e-30
    %v43 = vlog2.pop %v42
    %v44 = vmul.f32 %v43, 0.6931472
    %v45 = vadd.f32 %v26, %v44
    %v46 = vsub.f32 %v32, %v40
    %v47 = vmax.f32 %v46, 1e-30
    %v48 = vlog2.pop %v47
    %v49 = vmul.f32 %v48, 0.6931472
    %v50 = vadd.f32 %v26, %v49
    %51 = vrot.lane.b32.xlu0 %v15, 127
    %v52 = vpop.permute.xlu0 %51
    %v53 = vsub.f32 %v52, %v15
    %v54 = vsub.f32 %v50, %v45
    %56 = vset.pattern.permute.xlu0 0
    %57 = vperm.xlu0 %56, %v54
    %v58 = vpop.permute.xlu0 %57
    %v60 = vadd.f32 %v53, %v58
    %v61 = vmul.f32 %v60, %v60
    %v62 = vmax.f32 %v61, 0.0
    %v63 = vmin.f32 %v62, 16.0
    %vm64 = vcmp.lt.s32.totalorder %v19, %v36
    %v65 = vsel %vm64, %v63, 0.0
    %66 = vadd.xlane.f32.xlu0 %v65
    %v67 = vpop.xlane.xlu0 %66
    %v68 = vmul.f32 %v67, %v17
    %vm69 = vcmask 7168
    %v70 = vsel %vm69, %v68, 0.0
    %71 = vadd.xlane.f32.xlu0 %v70
    %v72 = vpop.xlane.xlu0 %71
    %v73 = vrot.slane %v72, 4
    %v74 = vadd.f32 %v72, %v73
    %v75 = vrot.slane %v74, 2
    %v76 = vadd.f32 %v74, %v75
    %v77 = vrot.slane %v76, 1
    %v78 = vadd.f32 %v76, %v77
    %s79 = vtos %v78
    %v80 = vstv %s79
    %vm81 = vcmask 0
    %82 = vst.msk [vmem:[#allocation2] sm:$0x1] %vm81, %v80
    // Predicated region
    $region14: #{tmse_loss.1} parent=1 // pred_check
      _
    $region15: #{tmse_loss.1} parent=1 // pred_check_branch
      %84 = sbr.rel (0) target = $region17
    $region16: #{tmse_loss.1} parent=1 // pred_region
      %86 = vsyncadd [#allocation3], 0
      %s88 = sshll.u32 [#allocation2], 4
      %s89 = int_to_ptr.vmem [resolvable:$true] %s88
      %s90 = sshll.u32 %s3, 4
      %s91 = int_to_ptr.hbm [resolvable:$true] %s90
      %93 = dma.vmem_to_hbm [thread:$0]  %s89, 16, %s91, [#allocation3]
    $region17: #{tmse_loss.1} parent=1 // pred_fallthru
      _
    // Predicated region
    $region18: #{tmse_loss.1} parent=1 // pred_check
      _
    $region19: #{tmse_loss.1} parent=1 // pred_check_branch
      %95 = sbr.rel (0) target = $region21
    $region20: #{tmse_loss.1} parent=1 // pred_region
      %97 = dma.done [#allocation3], 16
    $region21: #{tmse_loss.1} parent=1 // pred_fallthru
      _
    %98 = vsyncpa [#allocation3], 1

</llo_original>
